<compile_context>
chip_gen: v7x
topology: tpu7x:2x2x1
jax: 0.10.0
libtpu: 0.0.40
codegen_flags: <defaults>
</compile_context>

<pallas_src>
import functools

import jax
import jax.numpy as jnp
from jax import lax
from jax.experimental import pallas as pl
from jax.experimental.pallas import tpu as pltpu


def _round_up(a, m):
    return (a + m - 1) // m * m


def _mxu_tile(x, w, *, use_bf16):
    """x:(TM,TK) @ w:(TN,TK)^T -> (TM,TN), f32 accumulate, no weight transpose."""
    if use_bf16:
        x = x.astype(jnp.bfloat16)
        w = w.astype(jnp.bfloat16)
        prec = None
    else:
        prec = lax.Precision.HIGHEST
    return lax.dot_general(
        x, w,
        dimension_numbers=(((1,), (1,)), ((), ())),
        preferred_element_type=jnp.float32,
        precision=prec)


def _skip_linear_kernel(x_ref, w_ref, b_ref, o_ref, acc_ref, *, use_bf16):
    """Multi-K-step path.  One (TM, TN) output tile, reduced over the K axis.

    x_ref:   (TM, TK)  activation slice along the contraction dim (shared
                       with the residual: tn == tk, added when k == j)
    w_ref:   (TN, TK)  weight tile in PyTorch (out_features, in_features) layout
    b_ref:   (1,  TN)  bias tile
    o_ref:   (TM, TN)  output tile
    acc_ref: (TM, TN)  f32 accumulator scratch (persists across K steps)
    """
    j = pl.program_id(1)
    k = pl.program_id(2)

    contrib = _mxu_tile(x_ref[...], w_ref[...], use_bf16=use_bf16)

    @pl.when(k == 0)
    def _init():
        acc_ref[...] = contrib          # init with first matmul (no zero pass)

    @pl.when(k != 0)
    def _accum():
        acc_ref[...] += contrib

    # Residual: tn == tk, so the x tile streamed at k == j spans exactly the
    # output tile's columns -- no second activation input needed.
    @pl.when(k == j)
    def _residual():
        acc_ref[...] += x_ref[...].astype(jnp.float32)

    @pl.when(k == pl.num_programs(2) - 1)
    def _store():
        o_ref[...] = (acc_ref[...]
                      + b_ref[...].astype(jnp.float32)).astype(o_ref.dtype)


def _skip_linear_kernel_fast(x_ref, w_ref, b_ref, o_ref, *, use_bf16):
    """Single-K-step fast path (tn == tk == D): no accumulator scratch."""
    acc = _mxu_tile(x_ref[...], w_ref[...], use_bf16=use_bf16)
    acc += x_ref[...].astype(jnp.float32)          # residual
    acc += b_ref[...].astype(jnp.float32)          # bias
    o_ref[...] = acc.astype(o_ref.dtype)


def skip_connection_linear(x, weight, bias, *, tm=512, tnk=512, use_bf16=False):
    """out = x + x @ weight.T + bias   (residual fused in-kernel).

    x:      (B, S, D)
    weight: (D, D)   -- PyTorch nn.Linear convention (out_features, in_features)
    bias:   (D,)
    tnk:    shared N/K tile (tn == tk so the residual can reuse the x stream)
    """
    B, S, D = x.shape
    M = B * S
    x2d = x.reshape(M, D)
    b2d = bias.reshape(1, D)

    # ---- N/K tile: multiple of 128 that divides D, else full D -------------
    tnk = min(tnk, D)
    if D % tnk != 0 or (tnk % 128 != 0 and tnk != D):
        cand = (tnk // 128) * 128
        while cand >= 128 and D % cand != 0:
            cand -= 128
        tnk = cand if cand >= 128 else D
    n_k = D // tnk

    # ---- M tile: sublane-aligned, never pad more than one partial tile -----
    tm = max(8, min(_round_up(tm, 8), _round_up(M, 8)))
    # Feed both TensorCores on v7x: make sure there are >= 2 parallel steps.
    n_m_est = -(-M // tm)
    if n_m_est * (D // tnk) < 2 and M >= 16:
        tm = _round_up(-(-M // 2), 8)

    pad_m = (-M) % tm
    if pad_m:
        x2d = jnp.pad(x2d, ((0, pad_m), (0, 0)))
    Mp = M + pad_m

    # ---- VMEM budget: derive from device capacity, keep headroom -----------
    itemsize = jnp.dtype(x.dtype).itemsize
    try:
        vmem_cap = getattr(pltpu.get_tpu_info(), "vmem_capacity_bytes", 64 << 20)
    except Exception:  # pragma: no cover - conservative fallback
        vmem_cap = 64 << 20

    if n_k == 1:
        # Fast path: tn == tk == D, single grid axis over M.
        kernel = functools.partial(_skip_linear_kernel_fast, use_bf16=use_bf16)
        grid = (Mp // tm,)
        in_specs = [
            pl.BlockSpec((tm, D), lambda i: (i, 0)),      # x (shared residual)
            pl.BlockSpec((D, D), lambda i: (0, 0)),       # weight (out, in)
            pl.BlockSpec((1, D), lambda i: (0, 0)),       # bias
        ]
        out_specs = pl.BlockSpec((tm, D), lambda i: (i, 0))
        scratch_shapes = []
        dim_sem = ("parallel",)
        tile_bytes = (2 * tm * D + 2 * D * D + 2 * D + 2 * tm * D) * itemsize
    else:
        kernel = functools.partial(_skip_linear_kernel, use_bf16=use_bf16)
        grid = (Mp // tm, n_k, n_k)                       # tn == tk -> nj == nk
        in_specs = [
            pl.BlockSpec((tm, tnk), lambda i, j, k: (i, k)),    # x
            pl.BlockSpec((tnk, tnk), lambda i, j, k: (j, k)),   # weight (out, in)
            pl.BlockSpec((1, tnk), lambda i, j, k: (0, j)),     # bias
        ]
        out_specs = pl.BlockSpec((tm, tnk), lambda i, j, k: (i, j))
        scratch_shapes = [pltpu.VMEM((tm, tnk), jnp.float32)]
        dim_sem = ("parallel", "parallel", "arbitrary")
        tile_bytes = ((2 * tm * tnk + 2 * tnk * tnk + 2 * tnk + 2 * tm * tnk)
                      * itemsize + tm * tnk * 4)

    vmem_limit = int(min(max(int(tile_bytes * 1.5) + (8 << 20), 32 << 20),
                         int(vmem_cap * 0.75)))

    out = pl.pallas_call(
        kernel,
        out_shape=jax.ShapeDtypeStruct((Mp, D), x.dtype),
        grid_spec=pltpu.PrefetchScalarGridSpec(
            num_scalar_prefetch=0,
            grid=grid,
            in_specs=in_specs,
            out_specs=out_specs,
            scratch_shapes=scratch_shapes,
        ),
        compiler_params=pltpu.CompilerParams(
            dimension_semantics=dim_sem,
            vmem_limit_bytes=vmem_limit,
        ),
    )(x2d, weight, b2d)

    if pad_m:
        out = out[:M]
    return out.reshape(B, S, D)


if __name__ == "__main__":
    key = jax.random.PRNGKey(0)
    k_x, k_w, k_b, k_x2, k_w2, k_b2 = jax.random.split(key, 6)

    # ---- Case 1: small shapes, single-K-step fast path ---------------------
    B, S, D = 2, 8, 128
    x = jax.random.normal(k_x, (B, S, D), dtype=jnp.float32)
    bound = 1.0 / (D ** 0.5)
    weight = jax.random.uniform(k_w, (D, D), minval=-bound, maxval=bound,
                                dtype=jnp.float32)
    bias = jax.random.uniform(k_b, (D,), minval=-bound, maxval=bound,
                              dtype=jnp.float32)

    out = jax.block_until_ready(skip_connection_linear(x, weight, bias))
    ref = x + (jnp.einsum("bsd,ed->bse", x, weight,
                          precision=lax.Precision.HIGHEST) + bias)
    assert jnp.allclose(out, ref, atol=1e-4, rtol=1e-4), "fast-path mismatch"

    # ---- Case 2: multi-K-step path (residual folded from shared x stream) --
    D2 = 256
    x2 = jax.random.normal(k_x2, (B, S, D2), dtype=jnp.float32)
    bound2 = 1.0 / (D2 ** 0.5)
    weight2 = jax.random.uniform(k_w2, (D2, D2), minval=-bound2, maxval=bound2,
                                 dtype=jnp.float32)
    bias2 = jax.random.uniform(k_b2, (D2,), minval=-bound2, maxval=bound2,
                               dtype=jnp.float32)

    out2 = jax.block_until_ready(
        skip_connection_linear(x2, weight2, bias2, tnk=128))
    ref2 = x2 + (jnp.einsum("bsd,ed->bse", x2, weight2,
                            precision=lax.Precision.HIGHEST) + bias2)
    assert jnp.allclose(out2, ref2, atol=1e-4, rtol=1e-4), "tiled-path mismatch"

    print("KERNEL_OK")
</pallas_src>

<mosaic_0001>
module attributes {stable_mosaic.version = 11 : i64} {
  func.func @_skip_linear_kernel_fast(%arg0: i32, %arg1: memref<8x128xf32, #tpu.memory_space<vmem>>, %arg2: memref<128x128xf32, #tpu.memory_space<vmem>>, %arg3: memref<1x128xf32, #tpu.memory_space<vmem>>, %arg4: memref<8x128xf32, #tpu.memory_space<vmem>>) attributes {dimension_semantics = [#tpu.dimension_semantics<parallel>], iteration_bounds = array<i64: 2>, scalar_prefetch = 0 : i64, scratch_operands = 0 : i64, tpu.core_type = #tpu.core_type<tc>, window_params = [{transform_indices = @transform_0, window_bounds = array<i64: 8, 128>}, {pipeline_mode = #tpu.pipeline_mode<synchronous>, transform_indices = @transform_1, window_bounds = array<i64: 128, 128>}, {pipeline_mode = #tpu.pipeline_mode<synchronous>, transform_indices = @transform_2, window_bounds = array<i64: 1, 128>}, {transform_indices = @transform_3, window_bounds = array<i64: 8, 128>}]} {
    %c0 = arith.constant 0 : index
    %c0_0 = arith.constant 0 : index
    %0 = vector.load %arg1[%c0, %c0_0] : memref<8x128xf32, #tpu.memory_space<vmem>>, vector<8x128xf32>
    %c0_1 = arith.constant 0 : index
    %c0_2 = arith.constant 0 : index
    %1 = vector.load %arg2[%c0_1, %c0_2] : memref<128x128xf32, #tpu.memory_space<vmem>>, vector<128x128xf32>
    %cst = arith.constant dense<0.000000e+00> : vector<8x128xf32>
    %2 = tpu.matmul %0, %1, %cst {dimension_numbers = #tpu.dot_dimension_numbers<[1], [1], [0], [0], [0, 0, 1, 0], [], []>, precision = #tpu.contract_precision<fp32>} : vector<8x128xf32>, vector<128x128xf32>, vector<8x128xf32> -> vector<8x128xf32>
    %c0_3 = arith.constant 0 : index
    %c0_4 = arith.constant 0 : index
    %3 = vector.load %arg1[%c0_3, %c0_4] : memref<8x128xf32, #tpu.memory_space<vmem>>, vector<8x128xf32>
    %4 = arith.addf %2, %3 : vector<8x128xf32>
    %c0_5 = arith.constant 0 : index
    %c0_6 = arith.constant 0 : index
    %5 = vector.load %arg3[%c0_5, %c0_6] : memref<1x128xf32, #tpu.memory_space<vmem>>, vector<1x128xf32>
    %6 = vector.broadcast %5 : vector<1x128xf32> to vector<8x128xf32>
    %7 = arith.addf %4, %6 : vector<8x128xf32>
    %c0_7 = arith.constant 0 : index
    %c0_8 = arith.constant 0 : index
    %8 = vector.load %arg4[%c0_7, %c0_8] : memref<8x128xf32, #tpu.memory_space<vmem>>, vector<8x128xf32>
    tpu.vector_store %arg4[%c0_7, %c0_8], %7 {strides = array<i32>} : memref<8x128xf32, #tpu.memory_space<vmem>>, vector<8x128xf32>,
    return
  }
  func.func @transform_0(%arg0: i32) -> (i32, i32) {
    %c0_i32 = arith.constant 0 : i32
    %c0_i32_0 = arith.constant 0 : i32
    return %arg0, %c0_i32 : i32, i32
  }
  func.func @transform_1(%arg0: i32) -> (i32, i32) {
    %c0_i32 = arith.constant 0 : i32
    %c0_i32_0 = arith.constant 0 : i32
    %c0_i32_1 = arith.constant 0 : i32
    return %c0_i32, %c0_i32_0 : i32, i32
  }
  func.func @transform_2(%arg0: i32) -> (i32, i32) {
    %c0_i32 = arith.constant 0 : i32
    %c0_i32_0 = arith.constant 0 : i32
    %c0_i32_1 = arith.constant 0 : i32
    return %c0_i32, %c0_i32_0 : i32, i32
  }
  func.func @transform_3(%arg0: i32) -> (i32, i32) {
    %c0_i32 = arith.constant 0 : i32
    %c0_i32_0 = arith.constant 0 : i32
    return %arg0, %c0_i32 : i32, i32
  }
}

</mosaic_0001>

<llo_original>
// kernel: tpu_custom_call.1
$region0: #{tpu_custom_call.1}
  #allocation0 [shape = 'u32[]', space=smem, size = 0x4, offset = 0x4, fixed_abs, tag = 'smem constant byte address 0x4 - core index']
  #allocation1 [shape = 'u32[144,128]{1,0:T(1,128)}', space=vmem, size = 0x12000, scoped, tag = 'internal scratch']
  %s0 = inlined_call_operand.hbm [shape: f32[16,128], index: 0, kind: input, shape index: {}]
  %s1 = inlined_call_operand.hbm [shape: f32[128,128], index: 1, kind: input, shape index: {}]
  %s2 = inlined_call_operand.vmem [shape: f32[1,128], index: 2, kind: input, shape index: {}]
  %s3 = inlined_call_operand.hbm [shape: f32[16,128], index: 3, kind: output, shape index: {}]
  %s4 = sld [smem:[#allocation0]]
  $region53: #{tpu_custom_call.1} parent=0
    _
  %s6 = ssub.s32 1, %s4
  %s7 = scalar_select 0, %s6, %s4
  $region1: #{tpu_custom_call.1} parent=0
    #allocation2 [shape = 'u8[8192]{0}', space=vmem, size = 0x2000, scoped, tag = 'input window, operand 0']
    #allocation3 [shape = 's32[2]{0}', space=sflag, size = 0x8, scoped, tag = 'scoped memory for tpu_custom_call.1']
    #allocation4 [shape = 's32[2]{0}', space=sflag, size = 0x8, scoped, tag = 'scoped memory for tpu_custom_call.1']
    #allocation5 [shape = 'u8[65536]{0}', space=vmem, size = 0x10000, scoped, tag = 'input window, operand 1, single buffered']
    #allocation6 [shape = 's32[1]{0}', space=sflag, size = 0x4, scoped, tag = 'scoped memory for tpu_custom_call.1']
    #allocation7 [shape = 'u8[8192]{0}', space=vmem, size = 0x2000, scoped, tag = 'output window, operand 0']
    %8 = vsyncpa [#allocation3], 0
    %s9 = scalar_lea.sflag [#allocation3], 1
    %10 = vsyncpa %s9, 0
    %11 = vsyncpa [#allocation6], 0
    %12 = vsyncpa [#allocation4], 0
    %s13 = scalar_lea.sflag [#allocation4], 1
    %14 = vsyncpa %s13, 0
    loop: start=0, step=1, limit=4
    $region2: #{tpu_custom_call.1} parent=1 // loop_pre_header
      _
    $region3: #{tpu_custom_call.1} parent=1 // loop_header
      %s16 = sphi 0, %s20
      %p17 = scmp.ge.s32.totalorder %s16, 4
      %s26 = sphi 0, %s28
      %s29 = sphi 0, %s26
      %s30 = sphi 0, %s29
      %s46 = sphi 0, %s30
      %s50 = sphi 0, %s50
      %s52 = sphi 0, %s50
      %s53 = sphi 0, %s52
      %s67 = sphi 0, %s53
      %s71 = sphi 0, %s71
      %s73 = sphi 0, %s71
      %s74 = sphi 0, %s73
      %s88 = sphi 0, %s74
      %s94 = sphi 0, %s96
      %s97 = sphi 0, %s94
      %s98 = sphi 0, %s97
      %s114 = sphi 0, %s98
    $region4: #{tpu_custom_call.1} parent=1 // loop_header_branch
      %19 = sbr.rel (%p17) target = $region8
    $region5: #{tpu_custom_call.1} parent=1 // loop_body
      %s21 = ssub.s32 %s16, 1
      %s22 = ssub.s32 %s16, 2
      %s23 = sadd.s32 %s16, 1
      %s24 = ssub.s32 %s16, %s23
      %p25 = scmp.eq.s32.totalorder %s24, 0
      %s27 = sadd.s32 %s26, 1
      %s28 = scalar_select %p25, %s26, %s27
      %p31 = pneg %p25
      %p32 = scmp.eq.s32.totalorder %s16, 1
      %p33 = por %p31, %p32
      %p34 = scmp.ne.s32.totalorder %s26, %s29
      %p35 = scmp.eq.s32.totalorder %s16, 0
      %p36 = por %p34, %p35
      %p37 = scmp.ne.s32.totalorder %s26, %s29
      %p38 = scmp.eq.s32.totalorder %s21, 1
      %p39 = por %p37, %p38
      %p40 = scmp.ne.s32.totalorder %s29, %s30
      %p41 = scmp.eq.s32.totalorder %s21, 0
      %p42 = por %p40, %p41
      %p43 = scmp.ne.s32.totalorder %s29, %s30
      %p44 = scmp.eq.s32.totalorder %s22, 1
      %p45 = por %p43, %p44
      %p47 = scmp.ne.s32.totalorder %s30, %s46
      %p48 = scmp.eq.s32.totalorder %s22, 0
      %p49 = por %p47, %p48
      %s51 = sadd.s32 %s50, 1
      %p54 = scmp.eq.s32.totalorder %s16, 1
      %p55 = scmp.ne.s32.totalorder %s50, %s52
      %p56 = scmp.eq.s32.totalorder %s16, 0
      %p57 = por %p55, %p56
      %p58 = scmp.ne.s32.totalorder %s50, %s52
      %p59 = scmp.eq.s32.totalorder %s21, 1
      %p60 = por %p58, %p59
      %p61 = scmp.ne.s32.totalorder %s52, %s53
      %p62 = scmp.eq.s32.totalorder %s21, 0
      %p63 = por %p61, %p62
      %p64 = scmp.ne.s32.totalorder %s52, %s53
      %p65 = scmp.eq.s32.totalorder %s22, 1
      %p66 = por %p64, %p65
      %p68 = scmp.ne.s32.totalorder %s53, %s67
      %p69 = scmp.eq.s32.totalorder %s22, 0
      %p70 = por %p68, %p69
      %s72 = sadd.s32 %s71, 1
      %p75 = scmp.eq.s32.totalorder %s16, 1
      %p76 = scmp.ne.s32.totalorder %s71, %s73
      %p77 = scmp.eq.s32.totalorder %s16, 0
      %p78 = por %p76, %p77
      %p79 = scmp.ne.s32.totalorder %s71, %s73
      %p80 = scmp.eq.s32.totalorder %s21, 1
      %p81 = por %p79, %p80
      %p82 = scmp.ne.s32.totalorder %s73, %s74
      %p83 = scmp.eq.s32.totalorder %s21, 0
      %p84 = por %p82, %p83
      %p85 = scmp.ne.s32.totalorder %s73, %s74
      %p86 = scmp.eq.s32.totalorder %s22, 1
      %p87 = por %p85, %p86
      %p89 = scmp.ne.s32.totalorder %s74, %s88
      %p90 = scmp.eq.s32.totalorder %s22, 0
      %p91 = por %p89, %p90
      %s92 = ssub.s32 %s16, %s23
      %p93 = scmp.eq.s32.totalorder %s92, 0
      %s95 = sadd.s32 %s94, 1
      %s96 = scalar_select %p93, %s94, %s95
      %p99 = pneg %p93
      %p100 = scmp.eq.s32.totalorder %s16, 1
      %p101 = por %p99, %p100
      %p102 = scmp.ne.s32.totalorder %s94, %s97
      %p103 = scmp.eq.s32.totalorder %s16, 0
      %p104 = por %p102, %p103
      %p105 = scmp.ne.s32.totalorder %s94, %s97
      %p106 = scmp.eq.s32.totalorder %s21, 1
      %p107 = por %p105, %p106
      %p108 = scmp.ne.s32.totalorder %s97, %s98
      %p109 = scmp.eq.s32.totalorder %s21, 0
      %p110 = por %p108, %p109
      %p111 = scmp.ne.s32.totalorder %s97, %s98
      %p112 = scmp.eq.s32.totalorder %s22, 1
      %p113 = por %p111, %p112
      %p115 = scmp.ne.s32.totalorder %s98, %s114
      %p116 = scmp.eq.s32.totalorder %s22, 0
      %p117 = por %p115, %p116
      %p118 = scmp.le.s32.totalorder 1, %s16
      %p119 = scmp.lt.s32.totalorder %s16, 3
      %p120 = pnand %p118, %p119
      %p121 = pneg %p120
      // Predicated region
      $region9: #{tpu_custom_call.1} parent=5 // pred_check
        _
      $region10: #{tpu_custom_call.1} parent=5 // pred_check_branch
        %123 = sbr.rel (%p120) target = $region12
      $region11: #{tpu_custom_call.1} parent=5 // pred_region
        %s124 = ssub.s32 %s16, 1
        // Predicated region
        $region13: #{tpu_custom_call.1} parent=11 // pred_check
          %p125 = pneg %p63
        $region14: #{tpu_custom_call.1} parent=11 // pred_check_branch
          %127 = sbr.rel (%p125) target = $region16
        $region15: #{tpu_custom_call.1} parent=11 // pred_region
          %s129 = ssub.s32 2048, 2048
          %130 = vsyncadd [#allocation6], %s129
          %s131 = sshll.u32 [#allocation5], 4
          %s132 = int_to_ptr.vmem [resolvable:$true] %s131
          %137 = dma.hbm_to_vmem [thread:$0]  %s1, 2048, %s132, [#allocation6], 128, 128, 8
        $region16: #{tpu_custom_call.1} parent=11 // pred_fallthru
          _
        // Predicated region
        $region17: #{tpu_custom_call.1} parent=11 // pred_check
          %p138 = pneg %p84
        $region18: #{tpu_custom_call.1} parent=11 // pred_check_branch
          %140 = sbr.rel (%p138) target = $region20
        $region19: #{tpu_custom_call.1} parent=11 // pred_region
          _
        $region20: #{tpu_custom_call.1} parent=11 // pred_fallthru
          _
      $region12: #{tpu_custom_call.1} parent=5 // pred_fallthru
        _
      %p141 = scmp.lt.s32.totalorder %s16, 2
      // Predicated region
      $region21: #{tpu_custom_call.1} parent=5 // pred_check
        %p142 = pneg %p141
      $region22: #{tpu_custom_call.1} parent=5 // pred_check_branch
        %144 = sbr.rel (%p142) target = $region24
      $region23: #{tpu_custom_call.1} parent=5 // pred_region
        // Predicated region
        $region25: #{tpu_custom_call.1} parent=23 // pred_check
          %p145 = pneg %p36
        $region26: #{tpu_custom_call.1} parent=23 // pred_check_branch
          %147 = sbr.rel (%p145) target = $region28
        $region27: #{tpu_custom_call.1} parent=23 // pred_region
          %s148 = sand.u32 %s26, 1
          %s149 = scalar_lea.sflag [#allocation3], %s148
          %s150 = sand.u32 %s26, 1
          %s151 = smul.addr %s150, 8
          %s152 = scalar_lea.vmem [#allocation2], %s151
          %s154 = ssub.s32 128, 128
          %155 = vsyncadd %s149, %s154
          %s156 = smul.addr %s16, 128
          %s157 = scalar_lea.hbm %s0, %s156
          %s159 = sshll.u32 %s152, 4
          %s160 = int_to_ptr.vmem [resolvable:$true] %s159
          %162 = dma.hbm_to_vmem [thread:$0]  %s157, 128, %s160, %s149
        $region28: #{tpu_custom_call.1} parent=23 // pred_fallthru
          _
      $region24: #{tpu_custom_call.1} parent=5 // pred_fallthru
        _
      %p163 = scmp.le.s32.totalorder 1, %s16
      %p164 = scmp.lt.s32.totalorder %s16, 3
      %p165 = pnand %p163, %p164
      %p166 = pneg %p165
      // Predicated region
      $region29: #{tpu_custom_call.1} parent=5 // pred_check
        _
      $region30: #{tpu_custom_call.1} parent=5 // pred_check_branch
        %168 = sbr.rel (%p165) target = $region32
      $region31: #{tpu_custom_call.1} parent=5 // pred_region
        %s169 = ssub.s32 %s16, 1
        %s170 = sand.u32 %s29, 1
        %s171 = scalar_lea.sflag [#allocation3], %s170
        %s172 = sand.u32 %s29, 1
        %s173 = smul.addr %s172, 8
        %s174 = scalar_lea.vmem [#allocation2], %s173
        // Predicated region
        $region33: #{tpu_custom_call.1} parent=31 // pred_check
          %p175 = pneg %p42
        $region34: #{tpu_custom_call.1} parent=31 // pred_check_branch
          %177 = sbr.rel (%p175) target = $region36
        $region35: #{tpu_custom_call.1} parent=31 // pred_region
          %178 = dma.done %s171, 128
        $region36: #{tpu_custom_call.1} parent=31 // pred_fallthru
          _
        // Predicated region
        $region37: #{tpu_custom_call.1} parent=31 // pred_check
          %p179 = pneg %p63
        $region38: #{tpu_custom_call.1} parent=31 // pred_check_branch
          %181 = sbr.rel (%p179) target = $region40
        $region39: #{tpu_custom_call.1} parent=31 // pred_region
          %182 = dma.done [#allocation6], 2048
        $region40: #{tpu_custom_call.1} parent=31 // pred_fallthru
          _
        %s183 = sand.u32 %s29, 1
        %s184 = scalar_lea.sflag [#allocation3], %s183
        %s185 = sand.u32 %s29, 1
        %s186 = smul.addr %s185, 8
        %s187 = scalar_lea.vmem [#allocation2], %s186
        %p188 = pneg %p42
        %p189 = pneg %p39
        %p190 = pneg %p63
        %p191 = pneg %p60
        %p192 = pneg %p84
        %p193 = pneg %p81
        %p194 = pneg %p110
        %p195 = pneg %p107
        %s196 = sand.u32 %s97, 1
        %s197 = scalar_lea.sflag [#allocation4], %s196
        %s198 = sand.u32 %s97, 1
        %s199 = smul.addr %s198, 8
        %s200 = scalar_lea.vmem [#allocation7], %s199
        %v201 = vld [vmem:[%s174] sm:$0xff]
        %v202 = vld [vmem:[#allocation5] sm:$0xff]
        %v203 = vld [vmem:[#allocation5 + $0x8] sm:$0xff]
        %v204 = vld [vmem:[#allocation5 + $0x10] sm:$0xff]
        %v205 = vld [vmem:[#allocation5 + $0x18] sm:$0xff]
        %v206 = vld [vmem:[#allocation5 + $0x20] sm:$0xff]
        %v207 = vld [vmem:[#allocation5 + $0x28] sm:$0xff]
        %v208 = vld [vmem:[#allocation5 + $0x30] sm:$0xff]
        %v209 = vld [vmem:[#allocation5 + $0x38] sm:$0xff]
        %v210 = vld [vmem:[#allocation5 + $0x40] sm:$0xff]
        %v211 = vld [vmem:[#allocation5 + $0x48] sm:$0xff]
        %v212 = vld [vmem:[#allocation5 + $0x50] sm:$0xff]
        %v213 = vld [vmem:[#allocation5 + $0x58] sm:$0xff]
        %v214 = vld [vmem:[#allocation5 + $0x60] sm:$0xff]
        %v215 = vld [vmem:[#allocation5 + $0x68] sm:$0xff]
        %v216 = vld [vmem:[#allocation5 + $0x70] sm:$0xff]
        %v217 = vld [vmem:[#allocation5 + $0x78] sm:$0xff]
        %218 = vmatprep.subr.mxu0 0.0
        %v219 = vand.u32 %v202, 4294901760
        %220 = vmatpush1.xpose.msra.mxu0 %v219
        %221 = vmatprep.subr.mxu0 0.0
        %v222 = vand.u32 %v203, 4294901760
        %223 = vmatpush1.xpose.msra.mxu0 %v222
        %224 = vmatprep.subr.mxu0 0.0
        %v225 = vand.u32 %v204, 4294901760
        %226 = vmatpush1.xpose.msra.mxu0 %v225
        %227 = vmatprep.subr.mxu0 0.0
        %v228 = vand.u32 %v205, 4294901760
        %229 = vmatpush1.xpose.msra.mxu0 %v228
        %230 = vmatprep.subr.mxu0 0.0
        %v231 = vand.u32 %v206, 4294901760
        %232 = vmatpush1.xpose.msra.mxu0 %v231
        %233 = vmatprep.subr.mxu0 0.0
        %v234 = vand.u32 %v207, 4294901760
        %235 = vmatpush1.xpose.msra.mxu0 %v234
        %236 = vmatprep.subr.mxu0 0.0
        %v237 = vand.u32 %v208, 4294901760
        %238 = vmatpush1.xpose.msra.mxu0 %v237
        %239 = vmatprep.subr.mxu0 0.0
        %v240 = vand.u32 %v209, 4294901760
        %241 = vmatpush1.xpose.msra.mxu0 %v240
        %242 = vmatprep.subr.mxu0 0.0
        %v243 = vand.u32 %v210, 4294901760
        %244 = vmatpush1.xpose.msra.mxu0 %v243
        %245 = vmatprep.subr.mxu0 0.0
        %v246 = vand.u32 %v211, 4294901760
        %247 = vmatpush1.xpose.msra.mxu0 %v246
        %248 = vmatprep.subr.mxu0 0.0
        %v249 = vand.u32 %v212, 4294901760
        %250 = vmatpush1.xpose.msra.mxu0 %v249
        %251 = vmatprep.subr.mxu0 0.0
        %v252 = vand.u32 %v213, 4294901760
        %253 = vmatpush1.xpose.msra.mxu0 %v252
        %254 = vmatprep.subr.mxu0 0.0
        %v255 = vand.u32 %v214, 4294901760
        %256 = vmatpush1.xpose.msra.mxu0 %v255
        %257 = vmatprep.subr.mxu0 0.0
        %v258 = vand.u32 %v215, 4294901760
        %259 = vmatpush1.xpose.msra.mxu0 %v258
        %260 = vmatprep.subr.mxu0 0.0
        %v261 = vand.u32 %v216, 4294901760
        %262 = vmatpush1.xpose.msra.mxu0 %v261
        %263 = vmatprep.subr.mxu0 0.0
        %v264 = vand.u32 %v217, 4294901760
        %265 = vmatpush1.xpose.msra.mxu0 %v264
        %266 = vmatprep.subr.mxu0 0.0
        %267 = vmatpush1.xpose.msra.mxu0 0.0
        %268 = vmatprep.subr.mxu0 0.0
        %269 = vmatpush1.xpose.msra.mxu0 0.0
        %270 = vmatprep.subr.mxu0 0.0
        %271 = vmatpush1.xpose.msra.mxu0 0.0
        %272 = vmatprep.subr.mxu0 0.0
        %273 = vmatpush1.xpose.msra.mxu0 0.0
        %274 = vmatprep.subr.mxu0 0.0
        %275 = vmatpush1.xpose.msra.mxu0 0.0
        %276 = vmatprep.subr.mxu0 0.0
        %277 = vmatpush1.xpose.msra.mxu0 0.0
        %278 = vmatprep.subr.mxu0 0.0
        %279 = vmatpush1.xpose.msra.mxu0 0.0
        %280 = vmatprep.subr.mxu0 0.0
        %281 = vmatpush1.xpose.msra.mxu0 0.0
        %282 = vmatprep.subr.mxu0 0.0
        %283 = vmatpush1.xpose.msra.mxu0 0.0
        %284 = vmatprep.subr.mxu0 0.0
        %285 = vmatpush1.xpose.msra.mxu0 0.0
        %286 = vmatprep.subr.mxu0 0.0
        %287 = vmatpush1.xpose.msra.mxu0 0.0
        %288 = vmatprep.subr.mxu0 0.0
        %289 = vmatpush1.xpose.msra.mxu0 0.0
        %290 = vmatprep.subr.mxu0 0.0
        %291 = vmatpush1.xpose.msra.mxu0 0.0
        %292 = vmatprep.subr.mxu0 0.0
        %293 = vmatpush1.xpose.msra.mxu0 0.0
        %294 = vmatprep.subr.mxu0 0.0
        %295 = vmatpush1.xpose.msra.mxu0 0.0
        %296 = vmatprep.subr.mxu0 0.0
        %297 = vmatpush1.xpose.msra.mxu0 0.0
        %298 = vmatprep.mubr.f32.mxu0 0.0
        %v299 = vand.u32 %v201, 4294901760
        %v300 = vsub.f32 %v201, %v299
        %v301 = vand.u32 %v300, 4294901760
        %v302 = vsub.f32 %v300, %v301
        %v303 = vand.u32 %v302, 4294901760
        %304 = vmatmul.mubr.f32.gmra.mrb[0].mxu0 %v303
        %v305 = vpop.f32.mrb[0].mxu0
        %v306 = vadd.f32 %v201, %v305
        %v307 = vpop.f32.mrb[0].mxu0
        %308 = vdwg.mxu0
        %309 = vmatprep.subr.mxu0 0.0
        %v310 = vand.u32 %v202, 4294901760
        %v311 = vsub.f32 %v202, %v310
        %v312 = vand.u32 %v311, 4294901760
        %v313 = vsub.f32 %v311, %v312
        %v314 = vand.u32 %v313, 4294901760
        %315 = vmatpush1.xpose.msra.mxu0 %v314
        %316 = vmatprep.subr.mxu0 0.0
        %v317 = vand.u32 %v203, 4294901760
        %v318 = vsub.f32 %v203, %v317
        %v319 = vand.u32 %v318, 4294901760
        %v320 = vsub.f32 %v318, %v319
        %v321 = vand.u32 %v320, 4294901760
        %322 = vmatpush1.xpose.msra.mxu0 %v321
        %323 = vmatprep.subr.mxu0 0.0
        %v324 = vand.u32 %v204, 4294901760
        %v325 = vsub.f32 %v204, %v324
        %v326 = vand.u32 %v325, 4294901760
        %v327 = vsub.f32 %v325, %v326
        %v328 = vand.u32 %v327, 4294901760
        %329 = vmatpush1.xpose.msra.mxu0 %v328
        %330 = vmatprep.subr.mxu0 0.0
        %v331 = vand.u32 %v205, 4294901760
        %v332 = vsub.f32 %v205, %v331
        %v333 = vand.u32 %v332, 4294901760
        %v334 = vsub.f32 %v332, %v333
        %v335 = vand.u32 %v334, 4294901760
        %336 = vmatpush1.xpose.msra.mxu0 %v335
        %337 = vmatprep.subr.mxu0 0.0
        %v338 = vand.u32 %v206, 4294901760
        %v339 = vsub.f32 %v206, %v338
        %v340 = vand.u32 %v339, 4294901760
        %v341 = vsub.f32 %v339, %v340
        %v342 = vand.u32 %v341, 4294901760
        %343 = vmatpush1.xpose.msra.mxu0 %v342
        %344 = vmatprep.subr.mxu0 0.0
        %v345 = vand.u32 %v207, 4294901760
        %v346 = vsub.f32 %v207, %v345
        %v347 = vand.u32 %v346, 4294901760
        %v348 = vsub.f32 %v346, %v347
        %v349 = vand.u32 %v348, 4294901760
        %350 = vmatpush1.xpose.msra.mxu0 %v349
        %351 = vmatprep.subr.mxu0 0.0
        %v352 = vand.u32 %v208, 4294901760
        %v353 = vsub.f32 %v208, %v352
        %v354 = vand.u32 %v353, 4294901760
        %v355 = vsub.f32 %v353, %v354
        %v356 = vand.u32 %v355, 4294901760
        %357 = vmatpush1.xpose.msra.mxu0 %v356
        %358 = vmatprep.subr.mxu0 0.0
        %v359 = vand.u32 %v209, 4294901760
        %v360 = vsub.f32 %v209, %v359
        %v361 = vand.u32 %v360, 4294901760
        %v362 = vsub.f32 %v360, %v361
        %v363 = vand.u32 %v362, 4294901760
        %364 = vmatpush1.xpose.msra.mxu0 %v363
        %365 = vmatprep.subr.mxu0 0.0
        %v366 = vand.u32 %v210, 4294901760
        %v367 = vsub.f32 %v210, %v366
        %v368 = vand.u32 %v367, 4294901760
        %v369 = vsub.f32 %v367, %v368
        %v370 = vand.u32 %v369, 4294901760
        %371 = vmatpush1.xpose.msra.mxu0 %v370
        %372 = vmatprep.subr.mxu0 0.0
        %v373 = vand.u32 %v211, 4294901760
        %v374 = vsub.f32 %v211, %v373
        %v375 = vand.u32 %v374, 4294901760
        %v376 = vsub.f32 %v374, %v375
        %v377 = vand.u32 %v376, 4294901760
        %378 = vmatpush1.xpose.msra.mxu0 %v377
        %379 = vmatprep.subr.mxu0 0.0
        %v380 = vand.u32 %v212, 4294901760
        %v381 = vsub.f32 %v212, %v380
        %v382 = vand.u32 %v381, 4294901760
        %v383 = vsub.f32 %v381, %v382
        %v384 = vand.u32 %v383, 4294901760
        %385 = vmatpush1.xpose.msra.mxu0 %v384
        %386 = vmatprep.subr.mxu0 0.0
        %v387 = vand.u32 %v213, 4294901760
        %v388 = vsub.f32 %v213, %v387
        %v389 = vand.u32 %v388, 4294901760
        %v390 = vsub.f32 %v388, %v389
        %v391 = vand.u32 %v390, 4294901760
        %392 = vmatpush1.xpose.msra.mxu0 %v391
        %393 = vmatprep.subr.mxu0 0.0
        %v394 = vand.u32 %v214, 4294901760
        %v395 = vsub.f32 %v214, %v394
        %v396 = vand.u32 %v395, 4294901760
        %v397 = vsub.f32 %v395, %v396
        %v398 = vand.u32 %v397, 4294901760
        %399 = vmatpush1.xpose.msra.mxu0 %v398
        %400 = vmatprep.subr.mxu0 0.0
        %v401 = vand.u32 %v215, 4294901760
        %v402 = vsub.f32 %v215, %v401
        %v403 = vand.u32 %v402, 4294901760
        %v404 = vsub.f32 %v402, %v403
        %v405 = vand.u32 %v404, 4294901760
        %406 = vmatpush1.xpose.msra.mxu0 %v405
        %407 = vmatprep.subr.mxu0 0.0
        %v408 = vand.u32 %v216, 4294901760
        %v409 = vsub.f32 %v216, %v408
        %v410 = vand.u32 %v409, 4294901760
        %v411 = vsub.f32 %v409, %v410
        %v412 = vand.u32 %v411, 4294901760
        %413 = vmatpush1.xpose.msra.mxu0 %v412
        %414 = vmatprep.subr.mxu0 0.0
        %v415 = vand.u32 %v217, 4294901760
        %v416 = vsub.f32 %v217, %v415
        %v417 = vand.u32 %v416, 4294901760
        %v418 = vsub.f32 %v416, %v417
        %v419 = vand.u32 %v418, 4294901760
        %420 = vmatpush1.xpose.msra.mxu0 %v419
        %421 = vmatprep.subr.mxu0 0.0
        %422 = vmatpush1.xpose.msra.mxu0 0.0
        %423 = vmatprep.subr.mxu0 0.0
        %424 = vmatpush1.xpose.msra.mxu0 0.0
        %425 = vmatprep.subr.mxu0 0.0
        %426 = vmatpush1.xpose.msra.mxu0 0.0
        %427 = vmatprep.subr.mxu0 0.0
        %428 = vmatpush1.xpose.msra.mxu0 0.0
        %429 = vmatprep.subr.mxu0 0.0
        %430 = vmatpush1.xpose.msra.mxu0 0.0
        %431 = vmatprep.subr.mxu0 0.0
        %432 = vmatpush1.xpose.msra.mxu0 0.0
        %433 = vmatprep.subr.mxu0 0.0
        %434 = vmatpush1.xpose.msra.mxu0 0.0
        %435 = vmatprep.subr.mxu0 0.0
        %436 = vmatpush1.xpose.msra.mxu0 0.0
        %437 = vmatprep.subr.mxu0 0.0
        %438 = vmatpush1.xpose.msra.mxu0 0.0
        %439 = vmatprep.subr.mxu0 0.0
        %440 = vmatpush1.xpose.msra.mxu0 0.0
        %441 = vmatprep.subr.mxu0 0.0
        %442 = vmatpush1.xpose.msra.mxu0 0.0
        %443 = vmatprep.subr.mxu0 0.0
        %444 = vmatpush1.xpose.msra.mxu0 0.0
        %445 = vmatprep.subr.mxu0 0.0
        %446 = vmatpush1.xpose.msra.mxu0 0.0
        %447 = vmatprep.subr.mxu0 0.0
        %448 = vmatpush1.xpose.msra.mxu0 0.0
        %449 = vmatprep.subr.mxu0 0.0
        %450 = vmatpush1.xpose.msra.mxu0 0.0
        %451 = vmatprep.subr.mxu0 0.0
        %452 = vmatpush1.xpose.msra.mxu0 0.0
        %453 = vmatprep.mubr.f32.mxu0 0.0
        %v454 = vand.u32 %v201, 4294901760
        %455 = vmatmul.mubr.f32.gmra.mrb[0].mxu0 %v454
        %v456 = vpop.f32.mrb[0].mxu0
        %v457 = vadd.f32 %v306, %v456
        %v458 = vpop.f32.mrb[0].mxu0
        %459 = vdwg.mxu0
        %460 = vmatprep.subr.mxu0 0.0
        %v461 = vand.u32 %v202, 4294901760
        %v462 = vsub.f32 %v202, %v461
        %463 = vmatpush1.xpose.msra.mxu0 %v462
        %464 = vmatprep.subr.mxu0 0.0
        %v465 = vand.u32 %v203, 4294901760
        %v466 = vsub.f32 %v203, %v465
        %467 = vmatpush1.xpose.msra.mxu0 %v466
        %468 = vmatprep.subr.mxu0 0.0
        %v469 = vand.u32 %v204, 4294901760
        %v470 = vsub.f32 %v204, %v469
        %471 = vmatpush1.xpose.msra.mxu0 %v470
        %472 = vmatprep.subr.mxu0 0.0
        %v473 = vand.u32 %v205, 4294901760
        %v474 = vsub.f32 %v205, %v473
        %475 = vmatpush1.xpose.msra.mxu0 %v474
        %476 = vmatprep.subr.mxu0 0.0
        %v477 = vand.u32 %v206, 4294901760
        %v478 = vsub.f32 %v206, %v477
        %479 = vmatpush1.xpose.msra.mxu0 %v478
        %480 = vmatprep.subr.mxu0 0.0
        %v481 = vand.u32 %v207, 4294901760
        %v482 = vsub.f32 %v207, %v481
        %483 = vmatpush1.xpose.msra.mxu0 %v482
        %484 = vmatprep.subr.mxu0 0.0
        %v485 = vand.u32 %v208, 4294901760
        %v486 = vsub.f32 %v208, %v485
        %487 = vmatpush1.xpose.msra.mxu0 %v486
        %488 = vmatprep.subr.mxu0 0.0
        %v489 = vand.u32 %v209, 4294901760
        %v490 = vsub.f32 %v209, %v489
        %491 = vmatpush1.xpose.msra.mxu0 %v490
        %492 = vmatprep.subr.mxu0 0.0
        %v493 = vand.u32 %v210, 4294901760
        %v494 = vsub.f32 %v210, %v493
        %495 = vmatpush1.xpose.msra.mxu0 %v494
        %496 = vmatprep.subr.mxu0 0.0
        %v497 = vand.u32 %v211, 4294901760
        %v498 = vsub.f32 %v211, %v497
        %499 = vmatpush1.xpose.msra.mxu0 %v498
        %500 = vmatprep.subr.mxu0 0.0
        %v501 = vand.u32 %v212, 4294901760
        %v502 = vsub.f32 %v212, %v501
        %503 = vmatpush1.xpose.msra.mxu0 %v502
        %504 = vmatprep.subr.mxu0 0.0
        %v505 = vand.u32 %v213, 4294901760
        %v506 = vsub.f32 %v213, %v505
        %507 = vmatpush1.xpose.msra.mxu0 %v506
        %508 = vmatprep.subr.mxu0 0.0
        %v509 = vand.u32 %v214, 4294901760
        %v510 = vsub.f32 %v214, %v509
        %511 = vmatpush1.xpose.msra.mxu0 %v510
        %512 = vmatprep.subr.mxu0 0.0
        %v513 = vand.u32 %v215, 4294901760
        %v514 = vsub.f32 %v215, %v513
        %515 = vmatpush1.xpose.msra.mxu0 %v514
        %516 = vmatprep.subr.mxu0 0.0
        %v517 = vand.u32 %v216, 4294901760
        %v518 = vsub.f32 %v216, %v517
        %519 = vmatpush1.xpose.msra.mxu0 %v518
        %520 = vmatprep.subr.mxu0 0.0
        %v521 = vand.u32 %v217, 4294901760
        %v522 = vsub.f32 %v217, %v521
        %523 = vmatpush1.xpose.msra.mxu0 %v522
        %524 = vmatprep.subr.mxu0 0.0
        %525 = vmatpush1.xpose.msra.mxu0 0.0
        %526 = vmatprep.subr.mxu0 0.0
        %527 = vmatpush1.xpose.msra.mxu0 0.0
        %528 = vmatprep.subr.mxu0 0.0
        %529 = vmatpush1.xpose.msra.mxu0 0.0
        %530 = vmatprep.subr.mxu0 0.0
        %531 = vmatpush1.xpose.msra.mxu0 0.0
        %532 = vmatprep.subr.mxu0 0.0
        %533 = vmatpush1.xpose.msra.mxu0 0.0
        %534 = vmatprep.subr.mxu0 0.0
        %535 = vmatpush1.xpose.msra.mxu0 0.0
        %536 = vmatprep.subr.mxu0 0.0
        %537 = vmatpush1.xpose.msra.mxu0 0.0
        %538 = vmatprep.subr.mxu0 0.0
        %539 = vmatpush1.xpose.msra.mxu0 0.0
        %540 = vmatprep.subr.mxu0 0.0
        %541 = vmatpush1.xpose.msra.mxu0 0.0
        %542 = vmatprep.subr.mxu0 0.0
        %543 = vmatpush1.xpose.msra.mxu0 0.0
        %544 = vmatprep.subr.mxu0 0.0
        %545 = vmatpush1.xpose.msra.mxu0 0.0
        %546 = vmatprep.subr.mxu0 0.0
        %547 = vmatpush1.xpose.msra.mxu0 0.0
        %548 = vmatprep.subr.mxu0 0.0
        %549 = vmatpush1.xpose.msra.mxu0 0.0
        %550 = vmatprep.subr.mxu0 0.0
        %551 = vmatpush1.xpose.msra.mxu0 0.0
        %552 = vmatprep.subr.mxu0 0.0
        %553 = vmatpush1.xpose.msra.mxu0 0.0
        %554 = vmatprep.subr.mxu0 0.0
        %555 = vmatpush1.xpose.msra.mxu0 0.0
        %556 = vmatprep.mubr.f32.mxu0 0.0
        %v557 = vand.u32 %v201, 4294901760
        %v558 = vsub.f32 %v201, %v557
        %559 = vmatmul.mubr.f32.gmra.mrb[0].mxu0 %v558
        %v560 = vpop.f32.mrb[0].mxu0
        %v561 = vadd.f32 %v457, %v560
        %v562 = vpop.f32.mrb[0].mxu0
        %563 = vdwg.mxu0
        %564 = vmatprep.subr.mxu0 0.0
        %v565 = vand.u32 %v202, 4294901760
        %566 = vmatpush1.xpose.msra.mxu0 %v565
        %567 = vmatprep.subr.mxu0 0.0
        %v568 = vand.u32 %v203, 4294901760
        %569 = vmatpush1.xpose.msra.mxu0 %v568
        %570 = vmatprep.subr.mxu0 0.0
        %v571 = vand.u32 %v204, 4294901760
        %572 = vmatpush1.xpose.msra.mxu0 %v571
        %573 = vmatprep.subr.mxu0 0.0
        %v574 = vand.u32 %v205, 4294901760
        %575 = vmatpush1.xpose.msra.mxu0 %v574
        %576 = vmatprep.subr.mxu0 0.0
        %v577 = vand.u32 %v206, 4294901760
        %578 = vmatpush1.xpose.msra.mxu0 %v577
        %579 = vmatprep.subr.mxu0 0.0
        %v580 = vand.u32 %v207, 4294901760
        %581 = vmatpush1.xpose.msra.mxu0 %v580
        %582 = vmatprep.subr.mxu0 0.0
        %v583 = vand.u32 %v208, 4294901760
        %584 = vmatpush1.xpose.msra.mxu0 %v583
        %585 = vmatprep.subr.mxu0 0.0
        %v586 = vand.u32 %v209, 4294901760
        %587 = vmatpush1.xpose.msra.mxu0 %v586
        %588 = vmatprep.subr.mxu0 0.0
        %v589 = vand.u32 %v210, 4294901760
        %590 = vmatpush1.xpose.msra.mxu0 %v589
        %591 = vmatprep.subr.mxu0 0.0
        %v592 = vand.u32 %v211, 4294901760
        %593 = vmatpush1.xpose.msra.mxu0 %v592
        %594 = vmatprep.subr.mxu0 0.0
        %v595 = vand.u32 %v212, 4294901760
        %596 = vmatpush1.xpose.msra.mxu0 %v595
        %597 = vmatprep.subr.mxu0 0.0
        %v598 = vand.u32 %v213, 4294901760
        %599 = vmatpush1.xpose.msra.mxu0 %v598
        %600 = vmatprep.subr.mxu0 0.0
        %v601 = vand.u32 %v214, 4294901760
        %602 = vmatpush1.xpose.msra.mxu0 %v601
        %603 = vmatprep.subr.mxu0 0.0
        %v604 = vand.u32 %v215, 4294901760
        %605 = vmatpush1.xpose.msra.mxu0 %v604
        %606 = vmatprep.subr.mxu0 0.0
        %v607 = vand.u32 %v216, 4294901760
        %608 = vmatpush1.xpose.msra.mxu0 %v607
        %609 = vmatprep.subr.mxu0 0.0
        %v610 = vand.u32 %v217, 4294901760
        %611 = vmatpush1.xpose.msra.mxu0 %v610
        %612 = vmatprep.subr.mxu0 0.0
        %613 = vmatpush1.xpose.msra.mxu0 0.0
        %614 = vmatprep.subr.mxu0 0.0
        %615 = vmatpush1.xpose.msra.mxu0 0.0
        %616 = vmatprep.subr.mxu0 0.0
        %617 = vmatpush1.xpose.msra.mxu0 0.0
        %618 = vmatprep.subr.mxu0 0.0
        %619 = vmatpush1.xpose.msra.mxu0 0.0
        %620 = vmatprep.subr.mxu0 0.0
        %621 = vmatpush1.xpose.msra.mxu0 0.0
        %622 = vmatprep.subr.mxu0 0.0
        %623 = vmatpush1.xpose.msra.mxu0 0.0
        %624 = vmatprep.subr.mxu0 0.0
        %625 = vmatpush1.xpose.msra.mxu0 0.0
        %626 = vmatprep.subr.mxu0 0.0
        %627 = vmatpush1.xpose.msra.mxu0 0.0
        %628 = vmatprep.subr.mxu0 0.0
        %629 = vmatpush1.xpose.msra.mxu0 0.0
        %630 = vmatprep.subr.mxu0 0.0
        %631 = vmatpush1.xpose.msra.mxu0 0.0
        %632 = vmatprep.subr.mxu0 0.0
        %633 = vmatpush1.xpose.msra.mxu0 0.0
        %634 = vmatprep.subr.mxu0 0.0
        %635 = vmatpush1.xpose.msra.mxu0 0.0
        %636 = vmatprep.subr.mxu0 0.0
        %637 = vmatpush1.xpose.msra.mxu0 0.0
        %638 = vmatprep.subr.mxu0 0.0
        %639 = vmatpush1.xpose.msra.mxu0 0.0
        %640 = vmatprep.subr.mxu0 0.0
        %641 = vmatpush1.xpose.msra.mxu0 0.0
        %642 = vmatprep.subr.mxu0 0.0
        %643 = vmatpush1.xpose.msra.mxu0 0.0
        %644 = vmatprep.mubr.f32.mxu0 0.0
        %v645 = vand.u32 %v201, 4294901760
        %v646 = vsub.f32 %v201, %v645
        %v647 = vand.u32 %v646, 4294901760
        %648 = vmatmul.mubr.f32.gmra.mrb[0].mxu0 %v647
        %v649 = vpop.f32.mrb[0].mxu0
        %v650 = vadd.f32 %v561, %v649
        %v651 = vpop.f32.mrb[0].mxu0
        %652 = vdwg.mxu0
        %653 = vmatprep.subr.mxu0 0.0
        %v654 = vand.u32 %v202, 4294901760
        %v655 = vsub.f32 %v202, %v654
        %v656 = vand.u32 %v655, 4294901760
        %657 = vmatpush1.xpose.msra.mxu0 %v656
        %658 = vmatprep.subr.mxu0 0.0
        %v659 = vand.u32 %v203, 4294901760
        %v660 = vsub.f32 %v203, %v659
        %v661 = vand.u32 %v660, 4294901760
        %662 = vmatpush1.xpose.msra.mxu0 %v661
        %663 = vmatprep.subr.mxu0 0.0
        %v664 = vand.u32 %v204, 4294901760
        %v665 = vsub.f32 %v204, %v664
        %v666 = vand.u32 %v665, 4294901760
        %667 = vmatpush1.xpose.msra.mxu0 %v666
        %668 = vmatprep.subr.mxu0 0.0
        %v669 = vand.u32 %v205, 4294901760
        %v670 = vsub.f32 %v205, %v669
        %v671 = vand.u32 %v670, 4294901760
        %672 = vmatpush1.xpose.msra.mxu0 %v671
        %673 = vmatprep.subr.mxu0 0.0
        %v674 = vand.u32 %v206, 4294901760
        %v675 = vsub.f32 %v206, %v674
        %v676 = vand.u32 %v675, 4294901760
        %677 = vmatpush1.xpose.msra.mxu0 %v676
        %678 = vmatprep.subr.mxu0 0.0
        %v679 = vand.u32 %v207, 4294901760
        %v680 = vsub.f32 %v207, %v679
        %v681 = vand.u32 %v680, 4294901760
        %682 = vmatpush1.xpose.msra.mxu0 %v681
        %683 = vmatprep.subr.mxu0 0.0
        %v684 = vand.u32 %v208, 4294901760
        %v685 = vsub.f32 %v208, %v684
        %v686 = vand.u32 %v685, 4294901760
        %687 = vmatpush1.xpose.msra.mxu0 %v686
        %688 = vmatprep.subr.mxu0 0.0
        %v689 = vand.u32 %v209, 4294901760
        %v690 = vsub.f32 %v209, %v689
        %v691 = vand.u32 %v690, 4294901760
        %692 = vmatpush1.xpose.msra.mxu0 %v691
        %693 = vmatprep.subr.mxu0 0.0
        %v694 = vand.u32 %v210, 4294901760
        %v695 = vsub.f32 %v210, %v694
        %v696 = vand.u32 %v695, 4294901760
        %697 = vmatpush1.xpose.msra.mxu0 %v696
        %698 = vmatprep.subr.mxu0 0.0
        %v699 = vand.u32 %v211, 4294901760
        %v700 = vsub.f32 %v211, %v699
        %v701 = vand.u32 %v700, 4294901760
        %702 = vmatpush1.xpose.msra.mxu0 %v701
        %703 = vmatprep.subr.mxu0 0.0
        %v704 = vand.u32 %v212, 4294901760
        %v705 = vsub.f32 %v212, %v704
        %v706 = vand.u32 %v705, 4294901760
        %707 = vmatpush1.xpose.msra.mxu0 %v706
        %708 = vmatprep.subr.mxu0 0.0
        %v709 = vand.u32 %v213, 4294901760
        %v710 = vsub.f32 %v213, %v709
        %v711 = vand.u32 %v710, 4294901760
        %712 = vmatpush1.xpose.msra.mxu0 %v711
        %713 = vmatprep.subr.mxu0 0.0
        %v714 = vand.u32 %v214, 4294901760
        %v715 = vsub.f32 %v214, %v714
        %v716 = vand.u32 %v715, 4294901760
        %717 = vmatpush1.xpose.msra.mxu0 %v716
        %718 = vmatprep.subr.mxu0 0.0
        %v719 = vand.u32 %v215, 4294901760
        %v720 = vsub.f32 %v215, %v719
        %v721 = vand.u32 %v720, 4294901760
        %722 = vmatpush1.xpose.msra.mxu0 %v721
        %723 = vmatprep.subr.mxu0 0.0
        %v724 = vand.u32 %v216, 4294901760
        %v725 = vsub.f32 %v216, %v724
        %v726 = vand.u32 %v725, 4294901760
        %727 = vmatpush1.xpose.msra.mxu0 %v726
        %728 = vmatprep.subr.mxu0 0.0
        %v729 = vand.u32 %v217, 4294901760
        %v730 = vsub.f32 %v217, %v729
        %v731 = vand.u32 %v730, 4294901760
        %732 = vmatpush1.xpose.msra.mxu0 %v731
        %733 = vmatprep.subr.mxu0 0.0
        %734 = vmatpush1.xpose.msra.mxu0 0.0
        %735 = vmatprep.subr.mxu0 0.0
        %736 = vmatpush1.xpose.msra.mxu0 0.0
        %737 = vmatprep.subr.mxu0 0.0
        %738 = vmatpush1.xpose.msra.mxu0 0.0
        %739 = vmatprep.subr.mxu0 0.0
        %740 = vmatpush1.xpose.msra.mxu0 0.0
        %741 = vmatprep.subr.mxu0 0.0
        %742 = vmatpush1.xpose.msra.mxu0 0.0
        %743 = vmatprep.subr.mxu0 0.0
        %744 = vmatpush1.xpose.msra.mxu0 0.0
        %745 = vmatprep.subr.mxu0 0.0
        %746 = vmatpush1.xpose.msra.mxu0 0.0
        %747 = vmatprep.subr.mxu0 0.0
        %748 = vmatpush1.xpose.msra.mxu0 0.0
        %749 = vmatprep.subr.mxu0 0.0
        %750 = vmatpush1.xpose.msra.mxu0 0.0
        %751 = vmatprep.subr.mxu0 0.0
        %752 = vmatpush1.xpose.msra.mxu0 0.0
        %753 = vmatprep.subr.mxu0 0.0
        %754 = vmatpush1.xpose.msra.mxu0 0.0
        %755 = vmatprep.subr.mxu0 0.0
        %756 = vmatpush1.xpose.msra.mxu0 0.0
        %757 = vmatprep.subr.mxu0 0.0
        %758 = vmatpush1.xpose.msra.mxu0 0.0
        %759 = vmatprep.subr.mxu0 0.0
        %760 = vmatpush1.xpose.msra.mxu0 0.0
        %761 = vmatprep.subr.mxu0 0.0
        %762 = vmatpush1.xpose.msra.mxu0 0.0
        %763 = vmatprep.subr.mxu0 0.0
        %764 = vmatpush1.xpose.msra.mxu0 0.0
        %765 = vmatprep.mubr.f32.mxu0 0.0
        %v766 = vand.u32 %v201, 4294901760
        %767 = vmatmul.mubr.f32.gmra.mrb[0].mxu0 %v766
        %v768 = vpop.f32.mrb[0].mxu0
        %v769 = vadd.f32 %v650, %v768
        %v770 = vpop.f32.mrb[0].mxu0
        %771 = vdwg.mxu0
        %772 = vmatprep.subr.mxu0 0.0
        %v773 = vand.u32 %v202, 4294901760
        %774 = vmatpush1.xpose.msra.mxu0 %v773
        %775 = vmatprep.subr.mxu0 0.0
        %v776 = vand.u32 %v203, 4294901760
        %777 = vmatpush1.xpose.msra.mxu0 %v776
        %778 = vmatprep.subr.mxu0 0.0
        %v779 = vand.u32 %v204, 4294901760
        %780 = vmatpush1.xpose.msra.mxu0 %v779
        %781 = vmatprep.subr.mxu0 0.0
        %v782 = vand.u32 %v205, 4294901760
        %783 = vmatpush1.xpose.msra.mxu0 %v782
        %784 = vmatprep.subr.mxu0 0.0
        %v785 = vand.u32 %v206, 4294901760
        %786 = vmatpush1.xpose.msra.mxu0 %v785
        %787 = vmatprep.subr.mxu0 0.0
        %v788 = vand.u32 %v207, 4294901760
        %789 = vmatpush1.xpose.msra.mxu0 %v788
        %790 = vmatprep.subr.mxu0 0.0
        %v791 = vand.u32 %v208, 4294901760
        %792 = vmatpush1.xpose.msra.mxu0 %v791
        %793 = vmatprep.subr.mxu0 0.0
        %v794 = vand.u32 %v209, 4294901760
        %795 = vmatpush1.xpose.msra.mxu0 %v794
        %796 = vmatprep.subr.mxu0 0.0
        %v797 = vand.u32 %v210, 4294901760
        %798 = vmatpush1.xpose.msra.mxu0 %v797
        %799 = vmatprep.subr.mxu0 0.0
        %v800 = vand.u32 %v211, 4294901760
        %801 = vmatpush1.xpose.msra.mxu0 %v800
        %802 = vmatprep.subr.mxu0 0.0
        %v803 = vand.u32 %v212, 4294901760
        %804 = vmatpush1.xpose.msra.mxu0 %v803
        %805 = vmatprep.subr.mxu0 0.0
        %v806 = vand.u32 %v213, 4294901760
        %807 = vmatpush1.xpose.msra.mxu0 %v806
        %808 = vmatprep.subr.mxu0 0.0
        %v809 = vand.u32 %v214, 4294901760
        %810 = vmatpush1.xpose.msra.mxu0 %v809
        %811 = vmatprep.subr.mxu0 0.0
        %v812 = vand.u32 %v215, 4294901760
        %813 = vmatpush1.xpose.msra.mxu0 %v812
        %814 = vmatprep.subr.mxu0 0.0
        %v815 = vand.u32 %v216, 4294901760
        %816 = vmatpush1.xpose.msra.mxu0 %v815
        %817 = vmatprep.subr.mxu0 0.0
        %v818 = vand.u32 %v217, 4294901760
        %819 = vmatpush1.xpose.msra.mxu0 %v818
        %820 = vmatprep.subr.mxu0 0.0
        %821 = vmatpush1.xpose.msra.mxu0 0.0
        %822 = vmatprep.subr.mxu0 0.0
        %823 = vmatpush1.xpose.msra.mxu0 0.0
        %824 = vmatprep.subr.mxu0 0.0
        %825 = vmatpush1.xpose.msra.mxu0 0.0
        %826 = vmatprep.subr.mxu0 0.0
        %827 = vmatpush1.xpose.msra.mxu0 0.0
        %828 = vmatprep.subr.mxu0 0.0
        %829 = vmatpush1.xpose.msra.mxu0 0.0
        %830 = vmatprep.subr.mxu0 0.0
        %831 = vmatpush1.xpose.msra.mxu0 0.0
        %832 = vmatprep.subr.mxu0 0.0
        %833 = vmatpush1.xpose.msra.mxu0 0.0
        %834 = vmatprep.subr.mxu0 0.0
        %835 = vmatpush1.xpose.msra.mxu0 0.0
        %836 = vmatprep.subr.mxu0 0.0
        %837 = vmatpush1.xpose.msra.mxu0 0.0
        %838 = vmatprep.subr.mxu0 0.0
        %839 = vmatpush1.xpose.msra.mxu0 0.0
        %840 = vmatprep.subr.mxu0 0.0
        %841 = vmatpush1.xpose.msra.mxu0 0.0
        %842 = vmatprep.subr.mxu0 0.0
        %843 = vmatpush1.xpose.msra.mxu0 0.0
        %844 = vmatprep.subr.mxu0 0.0
        %845 = vmatpush1.xpose.msra.mxu0 0.0
        %846 = vmatprep.subr.mxu0 0.0
        %847 = vmatpush1.xpose.msra.mxu0 0.0
        %848 = vmatprep.subr.mxu0 0.0
        %849 = vmatpush1.xpose.msra.mxu0 0.0
        %850 = vmatprep.subr.mxu0 0.0
        %851 = vmatpush1.xpose.msra.mxu0 0.0
        %852 = vmatprep.mubr.f32.mxu0 0.0
        %v853 = vand.u32 %v201, 4294901760
        %854 = vmatmul.mubr.f32.gmra.mrb[0].mxu0 %v853
        %v855 = vpop.f32.mrb[0].mxu0
        %v856 = vadd.f32 %v769, %v855
        %v857 = vpop.f32.mrb[0].mxu0
        %858 = vdwg.mxu0
        %v859 = vld [vmem:[%s2] sm:$0x1]
        %v861 = vlaneseq
        %v862 = vshrl.u32 %v861, 7
        %v863 = vsub.s32 0, %v862
        %v864 = vrot.slane %v859, %v863
        %v866 = vadd.f32 %v856, %v864
        %867 = vst [vmem:[%s200] sm:$0xff] %v866
        %s868 = sand.u32 %s97, 1
        %s869 = scalar_lea.sflag [#allocation4], %s868
        %s870 = sand.u32 %s97, 1
        %s871 = smul.addr %s870, 8
        %s872 = scalar_lea.vmem [#allocation7], %s871
        // Predicated region
        $region41: #{tpu_custom_call.1} parent=31 // pred_check
          %p873 = pneg %p107
        $region42: #{tpu_custom_call.1} parent=31 // pred_check_branch
          %875 = sbr.rel (%p873) target = $region44
        $region43: #{tpu_custom_call.1} parent=31 // pred_region
          %s877 = ssub.s32 128, 128
          %878 = vsyncadd %s869, %s877
          %s879 = smul.addr %s21, 128
          %s880 = scalar_lea.hbm %s3, %s879
          %s882 = sshll.u32 %s872, 4
          %s883 = int_to_ptr.vmem [resolvable:$true] %s882
          %885 = dma.vmem_to_hbm [thread:$0]  %s883, 128, %s880, %s869
        $region44: #{tpu_custom_call.1} parent=31 // pred_fallthru
          _
      $region32: #{tpu_custom_call.1} parent=5 // pred_fallthru
        _
      %p886 = scmp.le.s32.totalorder 2, %s16
      // Predicated region
      $region45: #{tpu_custom_call.1} parent=5 // pred_check
        %p887 = pneg %p886
      $region46: #{tpu_custom_call.1} parent=5 // pred_check_branch
        %889 = sbr.rel (%p887) target = $region48
      $region47: #{tpu_custom_call.1} parent=5 // pred_region
        %s890 = ssub.s32 %s16, 2
        // Predicated region
        $region49: #{tpu_custom_call.1} parent=47 // pred_check
          %p891 = pneg %p113
        $region50: #{tpu_custom_call.1} parent=47 // pred_check_branch
          %893 = sbr.rel (%p891) target = $region52
        $region51: #{tpu_custom_call.1} parent=47 // pred_region
          %s894 = sand.u32 %s98, 1
          %s895 = scalar_lea.sflag [#allocation4], %s894
          %s896 = sand.u32 %s98, 1
          %s897 = smul.addr %s896, 8
          %s898 = scalar_lea.vmem [#allocation7], %s897
          %899 = dma.done %s895, 128
        $region52: #{tpu_custom_call.1} parent=47 // pred_fallthru
          _
      $region48: #{tpu_custom_call.1} parent=5 // pred_fallthru
        _
    $region6: #{tpu_custom_call.1} parent=1 // loop_footer
      %s20 = sadd.s32 1, %s16
    $region7: #{tpu_custom_call.1} parent=1 // loop_footer_branch
      %15 = sbr.rel target = $region3
    $region8: #{tpu_custom_call.1} parent=1 // loop_exit
      _
    %900 = vsyncpa [#allocation3], 1
    %s901 = scalar_lea.sflag [#allocation3], 1
    %902 = vsyncpa %s901, 1
    %903 = vsyncpa [#allocation6], 1
    %904 = vsyncpa [#allocation4], 1
    %s905 = scalar_lea.sflag [#allocation4], 1
    %906 = vsyncpa %s905, 1

</llo_original>
